<compile_context>
chip_gen: v6e
topology: v6e:2x2x1
jax: 0.10.0
libtpu: 0.0.40
codegen_flags: <defaults>
</compile_context>

<pallas_src>
import numpy as np
import jax
import jax.numpy as jnp
from jax import lax
from jax.experimental import pallas as pl
from jax.experimental.pallas import tpu as pltpu


def _round_up(x, m):
    return (x + m - 1) // m * m


def _vmem_limit_bytes(requested=48 * 1024 * 1024):
    # v7x has only 64 MiB VMEM per TensorCore; request an explicit budget with
    # headroom, clamped to what the local chip actually has.
    try:
        cap = pltpu.get_tpu_info().vmem_capacity_bytes
        return int(min(requested, (cap * 3) // 4))
    except Exception:
        return int(requested)


# ----------------------------------------------------------------------------
# Wrapper + kernel
# ----------------------------------------------------------------------------
def cnn_attention(x_nchw, wq, bq, wk, bk, wv, bv, gamma, *, tq=256):
    """x_nchw: (B, C, H, W) f32; wq/wk: (C//8, C); wv: (C, C); biases 1-D; gamma (1,)."""
    B, C, H, W = x_nchw.shape
    N = H * W
    C8 = wq.shape[0]

    Cp = _round_up(C, 128)            # lane-dense channel axis
    C8p = _round_up(C8, 128)          # padded q/k head dim (zero-padded columns)
    TQ = min(tq, _round_up(N, 8))     # query tile (multiple of 8 sublanes)
    N_pad = _round_up(N, TQ)
    n_q_tiles = N_pad // TQ

    # ---- layout transform: NCHW -> (B, N_pad, Cp), f32 (residual stays exact)
    x = jnp.transpose(x_nchw.reshape(B, C, N), (0, 2, 1)).astype(jnp.float32)
    x = jnp.pad(x, ((0, 0), (0, N_pad - N), (0, Cp - C)))

    # ---- fused + padded projection weights (bf16 for the MXU; biases stay f32)
    wqk_t = jnp.zeros((Cp, 2 * C8p), jnp.float32)
    wqk_t = wqk_t.at[:C, :C8].set(jnp.asarray(wq, jnp.float32).T)
    wqk_t = wqk_t.at[:C, C8p:C8p + C8].set(jnp.asarray(wk, jnp.float32).T)
    wqk_t = wqk_t.astype(jnp.bfloat16)

    bqk = jnp.zeros((1, 2 * C8p), jnp.float32)
    bqk = bqk.at[0, :C8].set(jnp.asarray(bq, jnp.float32))
    bqk = bqk.at[0, C8p:C8p + C8].set(jnp.asarray(bk, jnp.float32))

    wv_t = jnp.zeros((Cp, Cp), jnp.float32)
    wv_t = wv_t.at[:C, :C].set(jnp.asarray(wv, jnp.float32).T).astype(jnp.bfloat16)
    bv2 = jnp.zeros((1, Cp), jnp.float32).at[0, :C].set(jnp.asarray(bv, jnp.float32))

    gamma1 = jnp.asarray(gamma, jnp.float32).reshape(1)

    def kernel(x_ref, wqk_ref, bqk_ref, wv_ref, bv_ref, gamma_ref,
               o_ref, qk_scr, v_scr):
        qi = pl.program_id(1)

        # --- once per batch element: project the full token block into
        #     bf16 Q|K and V scratch, reused by every query tile.
        @pl.when(qi == 0)
        def _():
            x_all = x_ref[...].astype(jnp.bfloat16)                         # (N_pad, Cp)
            qk = jnp.dot(x_all, wqk_ref[...],
                         preferred_element_type=jnp.float32) + bqk_ref[...]
            qk_scr[...] = qk.astype(jnp.bfloat16)
            v = jnp.dot(x_all, wv_ref[...],
                        preferred_element_type=jnp.float32) + bv_ref[...]
            v_scr[...] = v.astype(jnp.bfloat16)

        # --- one query tile
        row0 = pl.multiple_of(qi * TQ, TQ)
        q = qk_scr[pl.ds(row0, TQ), pl.ds(0, C8p)]                          # (TQ, C8p) bf16
        k = qk_scr[:, pl.ds(C8p, C8p)]                                      # (N_pad, C8p) bf16

        # scores[i, j] = <q_i, k_j>  (contract last dims, no explicit k.T)
        scores = lax.dot_general(q, k, (((1,), (1,)), ((), ())),
                                 preferred_element_type=jnp.float32)        # (TQ, N_pad)
        if N_pad > N:  # static at trace time: mask padded key tokens
            key_idx = lax.broadcasted_iota(jnp.int32, scores.shape, 1)
            scores = jnp.where(key_idx < N, scores, jnp.float32(-1e30))

        # softmax over keys, in f32
        scores = scores - jnp.max(scores, axis=-1, keepdims=True)
        p = jnp.exp(scores)
        p = p * pl.reciprocal(jnp.sum(p, axis=-1, keepdims=True), approx=True)

        out = jnp.dot(p.astype(jnp.bfloat16), v_scr[...],
                      preferred_element_type=jnp.float32)                   # (TQ, Cp)

        x_tile = x_ref[pl.ds(row0, TQ), :]                                  # (TQ, Cp) f32
        o_ref[...] = (gamma_ref[0] * out + x_tile).astype(o_ref.dtype)

    out_padded = pl.pallas_call(
        kernel,
        out_shape=jax.ShapeDtypeStruct((B, N_pad, Cp), jnp.float32),
        grid_spec=pltpu.PrefetchScalarGridSpec(
            num_scalar_prefetch=0,
            grid=(B, n_q_tiles),
            in_specs=[
                pl.BlockSpec((pl.Squeezed(), N_pad, Cp), lambda b, q: (b, 0, 0)),  # x (all tokens, per batch)
                pl.BlockSpec((Cp, 2 * C8p), lambda b, q: (0, 0)),                  # [Wq | Wk]^T
                pl.BlockSpec((1, 2 * C8p), lambda b, q: (0, 0)),                   # [bq | bk]
                pl.BlockSpec((Cp, Cp), lambda b, q: (0, 0)),                       # Wv^T
                pl.BlockSpec((1, Cp), lambda b, q: (0, 0)),                        # bv
                pl.BlockSpec(memory_space=pltpu.MemorySpace.SMEM),                 # gamma (scalar)
            ],
            out_specs=pl.BlockSpec((pl.Squeezed(), TQ, Cp), lambda b, q: (b, q, 0)),
            scratch_shapes=[
                pltpu.VMEM((N_pad, 2 * C8p), jnp.bfloat16),   # Q | K  (per batch)
                pltpu.VMEM((N_pad, Cp), jnp.bfloat16),        # V      (per batch)
            ],
        ),
        compiler_params=pltpu.CompilerParams(
            dimension_semantics=("parallel", "arbitrary"),
            vmem_limit_bytes=_vmem_limit_bytes(),
        ),
    )(x, wqk_t, bqk, wv_t, bv2, gamma1)

    # (B, N_pad, Cp) -> strip padding -> NCHW
    out = out_padded[:, :N, :C]
    return jnp.transpose(out, (0, 2, 1)).reshape(B, C, H, W)


# ----------------------------------------------------------------------------
# Deterministic parameter init mirroring the PyTorch module:
# orthogonal_(gain=sqrt(2)) for conv weights, zeros for biases, gamma = 0.
# ----------------------------------------------------------------------------
def orthogonal_init(key, rows, cols, gain):
    n = max(rows, cols)
    a = np.asarray(jax.random.normal(key, (n, n), dtype=jnp.float32))
    q, r = np.linalg.qr(a)
    q = q * np.sign(np.diag(r))
    return (gain * q[:rows, :cols]).astype(np.float32)


def make_params(key, size):
    c8 = size // 8
    k1, k2, k3 = jax.random.split(key, 3)
    gain = float(np.sqrt(2.0))
    wq = orthogonal_init(k1, c8, size, gain)     # Conv2d(size, size//8, 1) weight (flattened)
    wk = orthogonal_init(k2, c8, size, gain)
    wv = orthogonal_init(k3, size, size, gain)
    bq = np.zeros((c8,), np.float32)
    bk = np.zeros((c8,), np.float32)
    bv = np.zeros((size,), np.float32)
    gamma = np.zeros((1,), np.float32)           # nn.Parameter(torch.zeros(1))
    return wq, bq, wk, bk, wv, bv, gamma


# ----------------------------------------------------------------------------
# Pure-JAX reference mirroring the PyTorch forward (bf16 matmul operands with
# f32 accumulation, matching the kernel's mixed-precision numerics).
# ----------------------------------------------------------------------------
def reference(x, wq, bq, wk, bk, wv, bv, gamma, matmul_dtype=jnp.bfloat16):
    B, C, H, W = x.shape
    N = H * W
    xf = jnp.transpose(x.reshape(B, C, N), (0, 2, 1)).astype(jnp.float32)   # (B, N, C)
    xm = xf.astype(matmul_dtype)

    wq_t = jnp.asarray(wq, jnp.float32).T.astype(matmul_dtype)
    wk_t = jnp.asarray(wk, jnp.float32).T.astype(matmul_dtype)
    wv_t = jnp.asarray(wv, jnp.float32).T.astype(matmul_dtype)

    q = jnp.einsum('bnc,co->bno', xm, wq_t,
                   preferred_element_type=jnp.float32) + bq[None, None, :]
    k = jnp.einsum('bnc,co->bno', xm, wk_t,
                   preferred_element_type=jnp.float32) + bk[None, None, :]
    v = jnp.einsum('bnc,co->bno', xm, wv_t,
                   preferred_element_type=jnp.float32) + bv[None, None, :]

    s = jnp.einsum('bio,bjo->bij', q.astype(matmul_dtype), k.astype(matmul_dtype),
                   preferred_element_type=jnp.float32)                      # (B, N, N)
    attn = jax.nn.softmax(s, axis=-1)
    out = jnp.einsum('bij,bjc->bic', attn.astype(matmul_dtype), v.astype(matmul_dtype),
                     preferred_element_type=jnp.float32)                    # (B, N, C)
    out = gamma[0] * out + xf
    return jnp.transpose(out, (0, 2, 1)).reshape(B, C, H, W)


if __name__ == "__main__":
    key = jax.random.PRNGKey(0)
    kx, kp = jax.random.split(key)

    B, C, H, W = 2, 32, 8, 8          # size=32 -> C//8 = 4, N = 64
    x = jax.random.normal(kx, (B, C, H, W), dtype=jnp.float32)

    wq, bq, wk, bk, wv, bv, gamma = make_params(kp, C)
    # gamma is 0 at init (as in the module); also test a nonzero gamma so the
    # attention path is actually exercised.
    for g in (gamma, np.array([0.5], np.float32)):
        out = jax.block_until_ready(cnn_attention(x, wq, bq, wk, bk, wv, bv, g))
        ref = reference(x, jnp.asarray(wq), jnp.asarray(bq), jnp.asarray(wk),
                        jnp.asarray(bk), jnp.asarray(wv), jnp.asarray(bv),
                        jnp.asarray(g))
        np.testing.assert_allclose(np.asarray(out), np.asarray(ref),
                                   rtol=2e-2, atol=2e-2)

    print("KERNEL_OK")
</pallas_src>

<mosaic_0001>
module attributes {stable_mosaic.version = 11 : i64} {
  func.func @kernel(%arg0: i32, %arg1: i32, %arg2: memref<1x64x128xf32, #tpu.memory_space<vmem>>, %arg3: memref<128x256xbf16, #tpu.memory_space<vmem>>, %arg4: memref<1x256xf32, #tpu.memory_space<vmem>>, %arg5: memref<128x128xbf16, #tpu.memory_space<vmem>>, %arg6: memref<1x128xf32, #tpu.memory_space<vmem>>, %arg7: memref<1xf32, #tpu.memory_space<smem>>, %arg8: memref<1x64x128xf32, #tpu.memory_space<vmem>>, %arg9: memref<64x256xbf16, #tpu.memory_space<vmem>>, %arg10: memref<64x128xbf16, #tpu.memory_space<vmem>>) attributes {dimension_semantics = [#tpu.dimension_semantics<parallel>, #tpu.dimension_semantics<arbitrary>], iteration_bounds = array<i64: 2, 1>, scalar_prefetch = 0 : i64, scratch_operands = 2 : i64, tpu.core_type = #tpu.core_type<tc>, window_params = [{transform_indices = @transform_0, window_bounds = array<i64: 1, 64, 128>}, {pipeline_mode = #tpu.pipeline_mode<synchronous>, transform_indices = @transform_1, window_bounds = array<i64: 128, 256>}, {pipeline_mode = #tpu.pipeline_mode<synchronous>, transform_indices = @transform_2, window_bounds = array<i64: 1, 256>}, {pipeline_mode = #tpu.pipeline_mode<synchronous>, transform_indices = @transform_3, window_bounds = array<i64: 128, 128>}, {pipeline_mode = #tpu.pipeline_mode<synchronous>, transform_indices = @transform_4, window_bounds = array<i64: 1, 128>}, {transform_indices = @transform_5, window_bounds = array<i64: 1>}, {transform_indices = @transform_6, window_bounds = array<i64: 1, 64, 128>}]} {
    %c0_i32 = arith.constant 0 : i32
    %0 = arith.cmpi eq, %arg1, %c0_i32 : i32
    %1 = arith.extui %0 : i1 to i32
    %c0_i32_0 = arith.constant 0 : i32
    %2 = arith.cmpi ne, %1, %c0_i32_0 : i32
    scf.if %2 {
      %c0_13 = arith.constant 0 : index
      %c0_14 = arith.constant 0 : index
      %c0_15 = arith.constant 0 : index
      %32 = vector.load %arg2[%c0_13, %c0_14, %c0_15] : memref<1x64x128xf32, #tpu.memory_space<vmem>>, vector<1x64x128xf32>
      %33 = vector.shape_cast %32 : vector<1x64x128xf32> to vector<64x128xf32>
      %34 = arith.truncf %33 : vector<64x128xf32> to vector<64x128xbf16>
      %c0_16 = arith.constant 0 : index
      %c0_17 = arith.constant 0 : index
      %35 = vector.load %arg3[%c0_16, %c0_17] : memref<128x256xbf16, #tpu.memory_space<vmem>>, vector<128x256xbf16>
      %cst_18 = arith.constant dense<0.000000e+00> : vector<64x256xf32>
      %36 = tpu.matmul %34, %35, %cst_18 {dimension_numbers = #tpu.dot_dimension_numbers<[1], [0], [0], [1], [0, 0, 1, 1], [], []>} : vector<64x128xbf16>, vector<128x256xbf16>, vector<64x256xf32> -> vector<64x256xf32>
      %c0_19 = arith.constant 0 : index
      %c0_20 = arith.constant 0 : index
      %37 = vector.load %arg4[%c0_19, %c0_20] : memref<1x256xf32, #tpu.memory_space<vmem>>, vector<1x256xf32>
      %38 = vector.broadcast %37 : vector<1x256xf32> to vector<64x256xf32>
      %39 = arith.addf %36, %38 : vector<64x256xf32>
      %40 = arith.truncf %39 : vector<64x256xf32> to vector<64x256xbf16>
      %c0_21 = arith.constant 0 : index
      %c0_22 = arith.constant 0 : index
      %41 = vector.load %arg9[%c0_21, %c0_22] : memref<64x256xbf16, #tpu.memory_space<vmem>>, vector<64x256xbf16>
      tpu.vector_store %arg9[%c0_21, %c0_22], %40 {strides = array<i32>} : memref<64x256xbf16, #tpu.memory_space<vmem>>, vector<64x256xbf16>,
      %c0_23 = arith.constant 0 : index
      %c0_24 = arith.constant 0 : index
      %42 = vector.load %arg5[%c0_23, %c0_24] : memref<128x128xbf16, #tpu.memory_space<vmem>>, vector<128x128xbf16>
      %cst_25 = arith.constant dense<0.000000e+00> : vector<64x128xf32>
      %43 = tpu.matmul %34, %42, %cst_25 {dimension_numbers = #tpu.dot_dimension_numbers<[1], [0], [0], [1], [0, 0, 1, 1], [], []>} : vector<64x128xbf16>, vector<128x128xbf16>, vector<64x128xf32> -> vector<64x128xf32>
      %c0_26 = arith.constant 0 : index
      %c0_27 = arith.constant 0 : index
      %44 = vector.load %arg6[%c0_26, %c0_27] : memref<1x128xf32, #tpu.memory_space<vmem>>, vector<1x128xf32>
      %45 = vector.broadcast %44 : vector<1x128xf32> to vector<64x128xf32>
      %46 = arith.addf %43, %45 : vector<64x128xf32>
      %47 = arith.truncf %46 : vector<64x128xf32> to vector<64x128xbf16>
      %c0_28 = arith.constant 0 : index
      %c0_29 = arith.constant 0 : index
      %48 = vector.load %arg10[%c0_28, %c0_29] : memref<64x128xbf16, #tpu.memory_space<vmem>>, vector<64x128xbf16>
      tpu.vector_store %arg10[%c0_28, %c0_29], %47 {strides = array<i32>} : memref<64x128xbf16, #tpu.memory_space<vmem>>, vector<64x128xbf16>,
    } else {
    }
    %c64_i32 = arith.constant 64 : i32
    %3 = arith.muli %arg1, %c64_i32 : i32
    %4 = tpu.assume_multiple %3, 64 : i32
    %5 = arith.index_cast %4 : i32 to index
    %c0 = arith.constant 0 : index
    %6 = vector.load %arg9[%5, %c0] : memref<64x256xbf16, #tpu.memory_space<vmem>>, vector<64x128xbf16>
    %c0_1 = arith.constant 0 : index
    %c128 = arith.constant 128 : index
    %7 = vector.load %arg9[%c0_1, %c128] : memref<64x256xbf16, #tpu.memory_space<vmem>>, vector<64x128xbf16>
    %cst = arith.constant dense<0.000000e+00> : vector<64x64xf32>
    %8 = tpu.matmul %6, %7, %cst {dimension_numbers = #tpu.dot_dimension_numbers<[1], [1], [0], [0], [0, 0, 1, 0], [], []>} : vector<64x128xbf16>, vector<64x128xbf16>, vector<64x64xf32> -> vector<64x64xf32>
    %cst_2 = arith.constant dense<0xFF800000> : vector<64xf32>
    %9 = vector.multi_reduction <maximumf>, %8, %cst_2 [1] : vector<64x64xf32> to vector<64xf32>
    %10 = vector.shape_cast %9 : vector<64xf32> to vector<64x1xf32>
    %11 = vector.broadcast %10 : vector<64x1xf32> to vector<64x64xf32>
    %12 = arith.subf %8, %11 : vector<64x64xf32>
    %13 = math.exp %12 : vector<64x64xf32>
    %cst_3 = arith.constant dense<0.000000e+00> : vector<64xf32>
    %14 = vector.multi_reduction <add>, %13, %cst_3 [1] : vector<64x64xf32> to vector<64xf32>
    %15 = vector.shape_cast %14 : vector<64xf32> to vector<64x1xf32>
    %16 = tpu.reciprocal %15 {approx = true} : vector<64x1xf32> -> vector<64x1xf32>
    %17 = vector.broadcast %16 : vector<64x1xf32> to vector<64x64xf32>
    %18 = arith.mulf %13, %17 : vector<64x64xf32>
    %19 = arith.truncf %18 : vector<64x64xf32> to vector<64x64xbf16>
    %c0_4 = arith.constant 0 : index
    %c0_5 = arith.constant 0 : index
    %20 = vector.load %arg10[%c0_4, %c0_5] : memref<64x128xbf16, #tpu.memory_space<vmem>>, vector<64x128xbf16>
    %cst_6 = arith.constant dense<0.000000e+00> : vector<64x128xf32>
    %21 = tpu.matmul %19, %20, %cst_6 {dimension_numbers = #tpu.dot_dimension_numbers<[1], [0], [0], [1], [0, 0, 1, 1], [], []>} : vector<64x64xbf16>, vector<64x128xbf16>, vector<64x128xf32> -> vector<64x128xf32>
    %c0_7 = arith.constant 0 : index
    %22 = arith.index_cast %4 : i32 to index
    %c0_8 = arith.constant 0 : index
    %23 = vector.load %arg2[%c0_7, %22, %c0_8] : memref<1x64x128xf32, #tpu.memory_space<vmem>>, vector<1x64x128xf32>
    %24 = vector.shape_cast %23 : vector<1x64x128xf32> to vector<64x128xf32>
    %c0_9 = arith.constant 0 : index
    %25 = memref.load %arg7[%c0_9] : memref<1xf32, #tpu.memory_space<smem>>
    %26 = vector.broadcast %25 : f32 to vector<64x128xf32>
    %27 = arith.mulf %26, %21 : vector<64x128xf32>
    %28 = arith.addf %27, %24 : vector<64x128xf32>
    %c0_10 = arith.constant 0 : index
    %c0_11 = arith.constant 0 : index
    %c0_12 = arith.constant 0 : index
    %29 = vector.load %arg8[%c0_10, %c0_11, %c0_12] : memref<1x64x128xf32, #tpu.memory_space<vmem>>, vector<1x64x128xf32>
    %30 = vector.shape_cast %29 : vector<1x64x128xf32> to vector<64x128xf32>
    %31 = vector.shape_cast %28 : vector<64x128xf32> to vector<1x64x128xf32>
    tpu.vector_store %arg8[%c0_10, %c0_11, %c0_12], %31 {strides = array<i32>} : memref<1x64x128xf32, #tpu.memory_space<vmem>>, vector<1x64x128xf32>,
    return
  }
  func.func @transform_0(%arg0: i32, %arg1: i32) -> (i32, i32, i32) {
    %c0_i32 = arith.constant 0 : i32
    %c0_i32_0 = arith.constant 0 : i32
    %c0_i32_1 = arith.constant 0 : i32
    return %arg0, %c0_i32, %c0_i32_0 : i32, i32, i32
  }
  func.func @transform_1(%arg0: i32, %arg1: i32) -> (i32, i32) {
    %c0_i32 = arith.constant 0 : i32
    %c0_i32_0 = arith.constant 0 : i32
    %c0_i32_1 = arith.constant 0 : i32
    return %c0_i32, %c0_i32_0 : i32, i32
  }
  func.func @transform_2(%arg0: i32, %arg1: i32) -> (i32, i32) {
    %c0_i32 = arith.constant 0 : i32
    %c0_i32_0 = arith.constant 0 : i32
    %c0_i32_1 = arith.constant 0 : i32
    return %c0_i32, %c0_i32_0 : i32, i32
  }
  func.func @transform_3(%arg0: i32, %arg1: i32) -> (i32, i32) {
    %c0_i32 = arith.constant 0 : i32
    %c0_i32_0 = arith.constant 0 : i32
    %c0_i32_1 = arith.constant 0 : i32
    return %c0_i32, %c0_i32_0 : i32, i32
  }
  func.func @transform_4(%arg0: i32, %arg1: i32) -> (i32, i32) {
    %c0_i32 = arith.constant 0 : i32
    %c0_i32_0 = arith.constant 0 : i32
    %c0_i32_1 = arith.constant 0 : i32
    return %c0_i32, %c0_i32_0 : i32, i32
  }
  func.func @transform_5(%arg0: i32, %arg1: i32) -> i32 {
    %c0_i32 = arith.constant 0 : i32
    %c0_i32_0 = arith.constant 0 : i32
    return %c0_i32 : i32
  }
  func.func @transform_6(%arg0: i32, %arg1: i32) -> (i32, i32, i32) {
    %c0_i32 = arith.constant 0 : i32
    %c0_i32_0 = arith.constant 0 : i32
    return %arg0, %arg1, %c0_i32 : i32, i32, i32
  }
}

</mosaic_0001>

<llo_original>
// kernel: tpu_custom_call.1
$region0: #{tpu_custom_call.1}
  #allocation0 [shape = 'u32[]', space=smem, size = 0x4, offset = 0x4, fixed_abs, tag = 'smem constant byte address 0x4 - core index']
  #allocation1 [shape = 'u32[144,128]{1,0:T(1,128)}', space=vmem, size = 0x12000, scoped, tag = 'internal scratch']
  #allocation2 [shape = 'bf16[64,256]{1,0:T(8,128)(2,1)}', space=vmem, size = 0x8000, scoped, tag = 'scratch operand']
  #allocation3 [shape = 'bf16[64,128]{1,0:T(8,128)(2,1)}', space=vmem, size = 0x4000, scoped, tag = 'scratch operand']
  #allocation4 [shape = 'f32[1]{0:T(128)S(6)}', space=smem, size = 0x200, scoped, tag = 'scoped memory for tpu_custom_call.1']
  %s0 = inlined_call_operand.hbm [shape: f32[2,64,128], index: 0, kind: input, shape index: {}]
  %s1 = inlined_call_operand.hbm [shape: bf16[128,256], index: 1, kind: input, shape index: {}]
  %s2 = inlined_call_operand.vmem [shape: f32[1,256], index: 2, kind: input, shape index: {}]
  %s3 = inlined_call_operand.hbm [shape: bf16[128,128], index: 3, kind: input, shape index: {}]
  %s4 = inlined_call_operand.vmem [shape: f32[1,128], index: 4, kind: input, shape index: {}]
  %s5 = inlined_call_operand.<no memory space> [shape: f32[1], index: 5, kind: input, shape index: {}]
  %s6 = inlined_call_operand.hbm [shape: f32[2,64,128], index: 6, kind: output, shape index: {}]
  %s7 = sld [smem:[#allocation0]]
  $region73: #{tpu_custom_call.1} parent=0
    _
  %s9 = ssub.s32 1, %s7
  %s10 = scalar_select 0, %s9, %s7
  %11 = sst [smem:[#allocation4]] %s5
  $region1: #{tpu_custom_call.1} parent=0
    #allocation5 [shape = 'u8[65536]{0}', space=vmem, size = 0x10000, scoped, tag = 'input window, operand 0']
    #allocation6 [shape = 's32[2]{0}', space=sflag, size = 0x8, scoped, tag = 'scoped memory for tpu_custom_call.1']
    #allocation7 [shape = 's32[2]{0}', space=sflag, size = 0x8, scoped, tag = 'scoped memory for tpu_custom_call.1']
    #allocation8 [shape = 'u8[65536]{0}', space=vmem, size = 0x10000, scoped, tag = 'input window, operand 1, single buffered']
    #allocation9 [shape = 's32[1]{0}', space=sflag, size = 0x4, scoped, tag = 'scoped memory for tpu_custom_call.1']
    #allocation10 [shape = 'u8[32768]{0}', space=vmem, size = 0x8000, scoped, tag = 'input window, operand 3, single buffered']
    #allocation11 [shape = 'u8[65536]{0}', space=vmem, size = 0x10000, scoped, tag = 'output window, operand 0']
    %12 = vsyncpa [#allocation6], 0
    %s13 = scalar_lea.sflag [#allocation6], 1
    %14 = vsyncpa %s13, 0
    %15 = vsyncpa [#allocation9], 0
    %16 = vsyncpa [#allocation7], 0
    %s17 = scalar_lea.sflag [#allocation7], 1
    %18 = vsyncpa %s17, 0
    loop: start=0, step=1, limit=4
    $region2: #{tpu_custom_call.1} parent=1 // loop_pre_header
      _
    $region3: #{tpu_custom_call.1} parent=1 // loop_header
      %s20 = sphi 0, %s24
      %p21 = scmp.ge.s32.totalorder %s20, 4
      %s27 = sphi 0, %s39
      %s28 = sphi 0, %s35
      %s29 = sphi 0, %s27
      %s30 = sphi 0, %s28
      %s31 = sphi 0, %s29
      %s32 = sphi 0, %s30
      %s42 = sphi 0, %s44
      %s45 = sphi 0, %s42
      %s46 = sphi 0, %s45
      %s62 = sphi 0, %s46
      %s66 = sphi 0, %s66
      %s68 = sphi 0, %s66
      %s69 = sphi 0, %s68
      %s83 = sphi 0, %s69
      %s87 = sphi 0, %s87
      %s89 = sphi 0, %s87
      %s90 = sphi 0, %s89
      %s104 = sphi 0, %s90
      %s108 = sphi 0, %s108
      %s110 = sphi 0, %s108
      %s111 = sphi 0, %s110
      %s125 = sphi 0, %s111
      %s129 = sphi 0, %s129
      %s131 = sphi 0, %s129
      %s132 = sphi 0, %s131
      %s146 = sphi 0, %s132
      %s150 = sphi 0, %s150
      %s152 = sphi 0, %s150
      %s153 = sphi 0, %s152
      %s167 = sphi 0, %s153
      %s175 = sphi 0, %s177
      %s178 = sphi 0, %s175
      %s179 = sphi 0, %s178
      %s195 = sphi 0, %s179
    $region4: #{tpu_custom_call.1} parent=1 // loop_header_branch
      %23 = sbr.rel (%p21) target = $region8
    $region5: #{tpu_custom_call.1} parent=1 // loop_body
      %s25 = ssub.s32 %s20, 1
      %s26 = ssub.s32 %s20, 2
      %s33 = sadd.s32 1, %s28
      %p34 = scmp.ge.s32.totalorder %s33, 1
      %s35 = scalar_select %p34, 0, %s33
      %s36 = sadd.s32 1, %s27
      %s37 = scalar_select %p34, %s36, %s27
      %p38 = scmp.ge.s32.totalorder %s37, 2
      %s39 = scalar_select %p38, 0, %s37
      %s40 = ssub.s32 %s27, %s39
      %p41 = scmp.eq.s32.totalorder %s40, 0
      %s43 = sadd.s32 %s42, 1
      %s44 = scalar_select %p41, %s42, %s43
      %p47 = pneg %p41
      %p48 = scmp.eq.s32.totalorder %s20, 1
      %p49 = por %p47, %p48
      %p50 = scmp.ne.s32.totalorder %s42, %s45
      %p51 = scmp.eq.s32.totalorder %s20, 0
      %p52 = por %p50, %p51
      %p53 = scmp.ne.s32.totalorder %s42, %s45
      %p54 = scmp.eq.s32.totalorder %s25, 1
      %p55 = por %p53, %p54
      %p56 = scmp.ne.s32.totalorder %s45, %s46
      %p57 = scmp.eq.s32.totalorder %s25, 0
      %p58 = por %p56, %p57
      %p59 = scmp.ne.s32.totalorder %s45, %s46
      %p60 = scmp.eq.s32.totalorder %s26, 1
      %p61 = por %p59, %p60
      %p63 = scmp.ne.s32.totalorder %s46, %s62
      %p64 = scmp.eq.s32.totalorder %s26, 0
      %p65 = por %p63, %p64
      %s67 = sadd.s32 %s66, 1
      %p70 = scmp.eq.s32.totalorder %s20, 1
      %p71 = scmp.ne.s32.totalorder %s66, %s68
      %p72 = scmp.eq.s32.totalorder %s20, 0
      %p73 = por %p71, %p72
      %p74 = scmp.ne.s32.totalorder %s66, %s68
      %p75 = scmp.eq.s32.totalorder %s25, 1
      %p76 = por %p74, %p75
      %p77 = scmp.ne.s32.totalorder %s68, %s69
      %p78 = scmp.eq.s32.totalorder %s25, 0
      %p79 = por %p77, %p78
      %p80 = scmp.ne.s32.totalorder %s68, %s69
      %p81 = scmp.eq.s32.totalorder %s26, 1
      %p82 = por %p80, %p81
      %p84 = scmp.ne.s32.totalorder %s69, %s83
      %p85 = scmp.eq.s32.totalorder %s26, 0
      %p86 = por %p84, %p85
      %s88 = sadd.s32 %s87, 1
      %p91 = scmp.eq.s32.totalorder %s20, 1
      %p92 = scmp.ne.s32.totalorder %s87, %s89
      %p93 = scmp.eq.s32.totalorder %s20, 0
      %p94 = por %p92, %p93
      %p95 = scmp.ne.s32.totalorder %s87, %s89
      %p96 = scmp.eq.s32.totalorder %s25, 1
      %p97 = por %p95, %p96
      %p98 = scmp.ne.s32.totalorder %s89, %s90
      %p99 = scmp.eq.s32.totalorder %s25, 0
      %p100 = por %p98, %p99
      %p101 = scmp.ne.s32.totalorder %s89, %s90
      %p102 = scmp.eq.s32.totalorder %s26, 1
      %p103 = por %p101, %p102
      %p105 = scmp.ne.s32.totalorder %s90, %s104
      %p106 = scmp.eq.s32.totalorder %s26, 0
      %p107 = por %p105, %p106
      %s109 = sadd.s32 %s108, 1
      %p112 = scmp.eq.s32.totalorder %s20, 1
      %p113 = scmp.ne.s32.totalorder %s108, %s110
      %p114 = scmp.eq.s32.totalorder %s20, 0
      %p115 = por %p113, %p114
      %p116 = scmp.ne.s32.totalorder %s108, %s110
      %p117 = scmp.eq.s32.totalorder %s25, 1
      %p118 = por %p116, %p117
      %p119 = scmp.ne.s32.totalorder %s110, %s111
      %p120 = scmp.eq.s32.totalorder %s25, 0
      %p121 = por %p119, %p120
      %p122 = scmp.ne.s32.totalorder %s110, %s111
      %p123 = scmp.eq.s32.totalorder %s26, 1
      %p124 = por %p122, %p123
      %p126 = scmp.ne.s32.totalorder %s111, %s125
      %p127 = scmp.eq.s32.totalorder %s26, 0
      %p128 = por %p126, %p127
      %s130 = sadd.s32 %s129, 1
      %p133 = scmp.eq.s32.totalorder %s20, 1
      %p134 = scmp.ne.s32.totalorder %s129, %s131
      %p135 = scmp.eq.s32.totalorder %s20, 0
      %p136 = por %p134, %p135
      %p137 = scmp.ne.s32.totalorder %s129, %s131
      %p138 = scmp.eq.s32.totalorder %s25, 1
      %p139 = por %p137, %p138
      %p140 = scmp.ne.s32.totalorder %s131, %s132
      %p141 = scmp.eq.s32.totalorder %s25, 0
      %p142 = por %p140, %p141
      %p143 = scmp.ne.s32.totalorder %s131, %s132
      %p144 = scmp.eq.s32.totalorder %s26, 1
      %p145 = por %p143, %p144
      %p147 = scmp.ne.s32.totalorder %s132, %s146
      %p148 = scmp.eq.s32.totalorder %s26, 0
      %p149 = por %p147, %p148
      %s151 = sadd.s32 %s150, 1
      %p154 = scmp.eq.s32.totalorder %s20, 1
      %p155 = scmp.ne.s32.totalorder %s150, %s152
      %p156 = scmp.eq.s32.totalorder %s20, 0
      %p157 = por %p155, %p156
      %p158 = scmp.ne.s32.totalorder %s150, %s152
      %p159 = scmp.eq.s32.totalorder %s25, 1
      %p160 = por %p158, %p159
      %p161 = scmp.ne.s32.totalorder %s152, %s153
      %p162 = scmp.eq.s32.totalorder %s25, 0
      %p163 = por %p161, %p162
      %p164 = scmp.ne.s32.totalorder %s152, %s153
      %p165 = scmp.eq.s32.totalorder %s26, 1
      %p166 = por %p164, %p165
      %p168 = scmp.ne.s32.totalorder %s153, %s167
      %p169 = scmp.eq.s32.totalorder %s26, 0
      %p170 = por %p168, %p169
      %s171 = ssub.s32 %s27, %s39
      %s172 = ssub.s32 %s28, %s35
      %s173 = sor.u32 %s171, %s172
      %p174 = scmp.eq.s32.totalorder %s173, 0
      %s176 = sadd.s32 %s175, 1
      %s177 = scalar_select %p174, %s175, %s176
      %p180 = pneg %p174
      %p181 = scmp.eq.s32.totalorder %s20, 1
      %p182 = por %p180, %p181
      %p183 = scmp.ne.s32.totalorder %s175, %s178
      %p184 = scmp.eq.s32.totalorder %s20, 0
      %p185 = por %p183, %p184
      %p186 = scmp.ne.s32.totalorder %s175, %s178
      %p187 = scmp.eq.s32.totalorder %s25, 1
      %p188 = por %p186, %p187
      %p189 = scmp.ne.s32.totalorder %s178, %s179
      %p190 = scmp.eq.s32.totalorder %s25, 0
      %p191 = por %p189, %p190
      %p192 = scmp.ne.s32.totalorder %s178, %s179
      %p193 = scmp.eq.s32.totalorder %s26, 1
      %p194 = por %p192, %p193
      %p196 = scmp.ne.s32.totalorder %s179, %s195
      %p197 = scmp.eq.s32.totalorder %s26, 0
      %p198 = por %p196, %p197
      %p199 = scmp.le.s32.totalorder 1, %s20
      %p200 = scmp.lt.s32.totalorder %s20, 3
      %p201 = pnand %p199, %p200
      %p202 = pneg %p201
      // Predicated region
      $region9: #{tpu_custom_call.1} parent=5 // pred_check
        _
      $region10: #{tpu_custom_call.1} parent=5 // pred_check_branch
        %204 = sbr.rel (%p201) target = $region12
      $region11: #{tpu_custom_call.1} parent=5 // pred_region
        %s205 = ssub.s32 %s20, 1
        // Predicated region
        $region13: #{tpu_custom_call.1} parent=11 // pred_check
          %p206 = pneg %p79
        $region14: #{tpu_custom_call.1} parent=11 // pred_check_branch
          %208 = sbr.rel (%p206) target = $region16
        $region15: #{tpu_custom_call.1} parent=11 // pred_region
          %s210 = ssub.s32 2048, 2048
          %211 = vsyncadd [#allocation9], %s210
          %s212 = sshll.u32 [#allocation8], 4
          %s213 = int_to_ptr.vmem [resolvable:$true] %s212
          %218 = dma.hbm_to_vmem [thread:$0]  %s1, 2048, %s213, [#allocation9], 128, 128, 8
        $region16: #{tpu_custom_call.1} parent=11 // pred_fallthru
          _
        // Predicated region
        $region17: #{tpu_custom_call.1} parent=11 // pred_check
          %p219 = pneg %p100
        $region18: #{tpu_custom_call.1} parent=11 // pred_check_branch
          %221 = sbr.rel (%p219) target = $region20
        $region19: #{tpu_custom_call.1} parent=11 // pred_region
          _
        $region20: #{tpu_custom_call.1} parent=11 // pred_fallthru
          _
        // Predicated region
        $region21: #{tpu_custom_call.1} parent=11 // pred_check
          %p222 = pneg %p121
        $region22: #{tpu_custom_call.1} parent=11 // pred_check_branch
          %224 = sbr.rel (%p222) target = $region24
        $region23: #{tpu_custom_call.1} parent=11 // pred_region
          %s226 = ssub.s32 1024, 1024
          %227 = vsyncadd [#allocation9], %s226
          %s228 = sshll.u32 [#allocation10], 4
          %s229 = int_to_ptr.vmem [resolvable:$true] %s228
          %234 = dma.hbm_to_vmem [thread:$0]  %s3, 1024, %s229, [#allocation9], 64, 64, 4
        $region24: #{tpu_custom_call.1} parent=11 // pred_fallthru
          _
        // Predicated region
        $region25: #{tpu_custom_call.1} parent=11 // pred_check
          %p235 = pneg %p142
        $region26: #{tpu_custom_call.1} parent=11 // pred_check_branch
          %237 = sbr.rel (%p235) target = $region28
        $region27: #{tpu_custom_call.1} parent=11 // pred_region
          _
        $region28: #{tpu_custom_call.1} parent=11 // pred_fallthru
          _
        // Predicated region
        $region29: #{tpu_custom_call.1} parent=11 // pred_check
          %p238 = pneg %p163
        $region30: #{tpu_custom_call.1} parent=11 // pred_check_branch
          %240 = sbr.rel (%p238) target = $region32
        $region31: #{tpu_custom_call.1} parent=11 // pred_region
          _
        $region32: #{tpu_custom_call.1} parent=11 // pred_fallthru
          _
      $region12: #{tpu_custom_call.1} parent=5 // pred_fallthru
        _
      %p241 = scmp.lt.s32.totalorder %s20, 2
      // Predicated region
      $region33: #{tpu_custom_call.1} parent=5 // pred_check
        %p242 = pneg %p241
      $region34: #{tpu_custom_call.1} parent=5 // pred_check_branch
        %244 = sbr.rel (%p242) target = $region36
      $region35: #{tpu_custom_call.1} parent=5 // pred_region
        // Predicated region
        $region37: #{tpu_custom_call.1} parent=35 // pred_check
          %p245 = pneg %p52
        $region38: #{tpu_custom_call.1} parent=35 // pred_check_branch
          %247 = sbr.rel (%p245) target = $region40
        $region39: #{tpu_custom_call.1} parent=35 // pred_region
          %s248 = sand.u32 %s42, 1
          %s249 = scalar_lea.sflag [#allocation6], %s248
          %s250 = sand.u32 %s42, 1
          %s251 = smul.addr %s250, 64
          %s252 = scalar_lea.vmem [#allocation5], %s251
          %s254 = ssub.s32 1024, 1024
          %255 = vsyncadd %s249, %s254
          %s256 = smul.addr %s27, 8
          %s257 = smul.addr %s256, 128
          %s258 = scalar_lea.hbm %s0, %s257
          %s259 = sshll.u32 %s252, 4
          %s260 = int_to_ptr.vmem [resolvable:$true] %s259
          %265 = dma.hbm_to_vmem [thread:$0]  %s258, 1024, %s260, %s249, 128, 128, 8
        $region40: #{tpu_custom_call.1} parent=35 // pred_fallthru
          _
      $region36: #{tpu_custom_call.1} parent=5 // pred_fallthru
        _
      %p266 = scmp.le.s32.totalorder 1, %s20
      %p267 = scmp.lt.s32.totalorder %s20, 3
      %p268 = pnand %p266, %p267
      %p269 = pneg %p268
      // Predicated region
      $region41: #{tpu_custom_call.1} parent=5 // pred_check
        _
      $region42: #{tpu_custom_call.1} parent=5 // pred_check_branch
        %271 = sbr.rel (%p268) target = $region44
      $region43: #{tpu_custom_call.1} parent=5 // pred_region
        %s272 = ssub.s32 %s20, 1
        %s273 = sand.u32 %s45, 1
        %s274 = scalar_lea.sflag [#allocation6], %s273
        %s275 = sand.u32 %s45, 1
        %s276 = smul.addr %s275, 64
        %s277 = scalar_lea.vmem [#allocation5], %s276
        // Predicated region
        $region45: #{tpu_custom_call.1} parent=43 // pred_check
          %p278 = pneg %p58
        $region46: #{tpu_custom_call.1} parent=43 // pred_check_branch
          %280 = sbr.rel (%p278) target = $region48
        $region47: #{tpu_custom_call.1} parent=43 // pred_region
          %281 = dma.done %s274, 1024
        $region48: #{tpu_custom_call.1} parent=43 // pred_fallthru
          _
        // Predicated region
        $region49: #{tpu_custom_call.1} parent=43 // pred_check
          %p282 = pneg %p79
        $region50: #{tpu_custom_call.1} parent=43 // pred_check_branch
          %284 = sbr.rel (%p282) target = $region52
        $region51: #{tpu_custom_call.1} parent=43 // pred_region
          %285 = dma.done [#allocation9], 2048
        $region52: #{tpu_custom_call.1} parent=43 // pred_fallthru
          _
        // Predicated region
        $region53: #{tpu_custom_call.1} parent=43 // pred_check
          %p286 = pneg %p121
        $region54: #{tpu_custom_call.1} parent=43 // pred_check_branch
          %288 = sbr.rel (%p286) target = $region56
        $region55: #{tpu_custom_call.1} parent=43 // pred_region
          %289 = dma.done [#allocation9], 1024
        $region56: #{tpu_custom_call.1} parent=43 // pred_fallthru
          _
        %s290 = sand.u32 %s45, 1
        %s291 = scalar_lea.sflag [#allocation6], %s290
        %s292 = sand.u32 %s45, 1
        %s293 = smul.addr %s292, 64
        %s294 = scalar_lea.vmem [#allocation5], %s293
        %p295 = pneg %p58
        %p296 = pneg %p55
        %p297 = pneg %p79
        %p298 = pneg %p76
        %p299 = pneg %p100
        %p300 = pneg %p97
        %p301 = pneg %p121
        %p302 = pneg %p118
        %p303 = pneg %p142
        %p304 = pneg %p139
        %p305 = pneg %p163
        %p306 = pneg %p160
        %p307 = pneg %p191
        %p308 = pneg %p188
        %s309 = sand.u32 %s178, 1
        %s310 = scalar_lea.sflag [#allocation7], %s309
        %s311 = sand.u32 %s178, 1
        %s312 = smul.addr %s311, 64
        %s313 = scalar_lea.vmem [#allocation11], %s312
        %s314 = smul.u32 8, %s30
        %p316 = scmp.eq.s32.totalorder %s30, 0
        // Predicated region
        $region57: #{tpu_custom_call.1} parent=43 // pred_check
          %p317 = pneg %p316
        $region58: #{tpu_custom_call.1} parent=43 // pred_check_branch
          %319 = sbr.rel (%p317) target = $region60
        $region59: #{tpu_custom_call.1} parent=43 // pred_region
          %v320 = vld [vmem:[%s277] sm:$0xff]
          %v321 = vld [vmem:[%s277 + $0x8] sm:$0xff]
          %v322 = vld [vmem:[%s277 + $0x10] sm:$0xff]
          %v323 = vld [vmem:[%s277 + $0x18] sm:$0xff]
          %v324 = vld [vmem:[%s277 + $0x20] sm:$0xff]
          %v325 = vld [vmem:[%s277 + $0x28] sm:$0xff]
          %v326 = vld [vmem:[%s277 + $0x30] sm:$0xff]
          %v327 = vld [vmem:[%s277 + $0x38] sm:$0xff]
          %v328 = vpack.c.bf16 %v321, %v320
          %v329 = vpack.c.bf16 %v323, %v322
          %v330 = vpack.c.bf16 %v325, %v324
          %v331 = vpack.c.bf16 %v327, %v326
          %v332 = vld [vmem:[#allocation8] sm:$0xff]
          %v333 = vld [vmem:[#allocation8 + $0x8] sm:$0xff]
          %v334 = vld [vmem:[#allocation8 + $0x10] sm:$0xff]
          %v335 = vld [vmem:[#allocation8 + $0x18] sm:$0xff]
          %v336 = vld [vmem:[#allocation8 + $0x20] sm:$0xff]
          %v337 = vld [vmem:[#allocation8 + $0x28] sm:$0xff]
          %v338 = vld [vmem:[#allocation8 + $0x30] sm:$0xff]
          %v339 = vld [vmem:[#allocation8 + $0x38] sm:$0xff]
          %v340 = vld [vmem:[#allocation8 + $0x40] sm:$0xff]
          %v341 = vld [vmem:[#allocation8 + $0x48] sm:$0xff]
          %v342 = vld [vmem:[#allocation8 + $0x50] sm:$0xff]
          %v343 = vld [vmem:[#allocation8 + $0x58] sm:$0xff]
          %v344 = vld [vmem:[#allocation8 + $0x60] sm:$0xff]
          %v345 = vld [vmem:[#allocation8 + $0x68] sm:$0xff]
          %v346 = vld [vmem:[#allocation8 + $0x70] sm:$0xff]
          %v347 = vld [vmem:[#allocation8 + $0x78] sm:$0xff]
          %v348 = vld [vmem:[%s2] sm:$0x3]
          %v350 = vlaneseq
          %v351 = vshrl.u32 %v350, 7
          %v352 = vsub.s32 0, %v351
          %v353 = vrot.slane %v348, %v352
          %v354 = vlaneseq
          %v355 = vshrl.u32 %v354, 7
          %v356 = vsub.s32 1, %v355
          %v357 = vrot.slane %v348, %v356
          %v376 = vunpack.c.l.b16 %v332
          %v377 = vunpack.c.h.b16 %v332
          %v378 = vunpack.c.l.b16 %v333
          %v379 = vunpack.c.h.b16 %v333
          %v380 = vunpack.c.l.b16 %v334
          %v381 = vunpack.c.h.b16 %v334
          %v382 = vunpack.c.l.b16 %v335
          %v383 = vunpack.c.h.b16 %v335
          %v384 = vunpack.c.l.b16 %v336
          %v385 = vunpack.c.h.b16 %v336
          %v386 = vunpack.c.l.b16 %v337
          %v387 = vunpack.c.h.b16 %v337
          %v388 = vunpack.c.l.b16 %v338
          %v389 = vunpack.c.h.b16 %v338
          %v390 = vunpack.c.l.b16 %v339
          %v391 = vunpack.c.h.b16 %v339
          %v392 = vunpack.c.l.b16 %v340
          %v393 = vunpack.c.h.b16 %v340
          %v394 = vunpack.c.l.b16 %v341
          %v395 = vunpack.c.h.b16 %v341
          %v396 = vunpack.c.l.b16 %v342
          %v397 = vunpack.c.h.b16 %v342
          %v398 = vunpack.c.l.b16 %v343
          %v399 = vunpack.c.h.b16 %v343
          %v400 = vunpack.c.l.b16 %v344
          %v401 = vunpack.c.h.b16 %v344
          %v402 = vunpack.c.l.b16 %v345
          %v403 = vunpack.c.h.b16 %v345
          %v404 = vunpack.c.l.b16 %v346
          %v405 = vunpack.c.h.b16 %v346
          %v406 = vunpack.c.l.b16 %v347
          %v407 = vunpack.c.h.b16 %v347
          %v408 = vpack.c.b16 %v378, %v376
          %v409 = vpack.c.b16 %v379, %v377
          %v410 = vpack.c.b16 %v382, %v380
          %v411 = vpack.c.b16 %v383, %v381
          %v412 = vpack.c.b16 %v386, %v384
          %v413 = vpack.c.b16 %v387, %v385
          %v414 = vpack.c.b16 %v390, %v388
          %v415 = vpack.c.b16 %v391, %v389
          %v416 = vpack.c.b16 %v394, %v392
          %v417 = vpack.c.b16 %v395, %v393
          %v418 = vpack.c.b16 %v398, %v396
          %v419 = vpack.c.b16 %v399, %v397
          %v420 = vpack.c.b16 %v402, %v400
          %v421 = vpack.c.b16 %v403, %v401
          %v422 = vpack.c.b16 %v406, %v404
          %v423 = vpack.c.b16 %v407, %v405
          %440 = vmatprep.subr.bf16.mxu0 %v423
          %441 = vmatpush1.bf16.msra.mxu0 %v422
          %442 = vmatprep.subr.bf16.mxu0 %v421
          %443 = vmatpush1.bf16.msra.mxu0 %v420
          %444 = vmatprep.subr.bf16.mxu0 %v419
          %445 = vmatpush1.bf16.msra.mxu0 %v418
          %446 = vmatprep.subr.bf16.mxu0 %v417
          %447 = vmatpush1.bf16.msra.mxu0 %v416
          %448 = vmatprep.subr.bf16.mxu0 %v415
          %449 = vmatpush1.bf16.msra.mxu0 %v414
          %450 = vmatprep.subr.bf16.mxu0 %v413
          %451 = vmatpush1.bf16.msra.mxu0 %v412
          %452 = vmatprep.subr.bf16.mxu0 %v411
          %453 = vmatpush1.bf16.msra.mxu0 %v410
          %454 = vmatprep.subr.bf16.mxu0 %v409
          %455 = vmatpush1.bf16.msra.mxu0 %v408
          %456 = vmatprep.subr.bf16.mxu0 0
          %457 = vmatpush2.bf16.msra.mxu0 0
          %458 = vmatprep.subr.bf16.mxu0 0
          %459 = vmatpush2.bf16.msra.mxu0 0
          %460 = vmatprep.subr.bf16.mxu0 0
          %461 = vmatpush2.bf16.msra.mxu0 0
          %462 = vmatprep.subr.bf16.mxu0 0
          %463 = vmatpush2.bf16.msra.mxu0 0
          %464 = vmatprep.subr.bf16.mxu0 0
          %465 = vmatpush2.bf16.msra.mxu0 0
          %466 = vmatprep.subr.bf16.mxu0 0
          %467 = vmatpush2.bf16.msra.mxu0 0
          %468 = vmatprep.subr.bf16.mxu0 0
          %469 = vmatpush2.bf16.msra.mxu0 0
          %470 = vmatprep.subr.bf16.mxu0 0
          %471 = vmatpush2.bf16.msra.mxu0 0
          %472 = vmatprep.mubr.bf16.mxu0 0
          %473 = vmatmul.mubr.bf16.gmra.mxu0 %v328
          %v474 = vpop.f32.mrf.mxu0
          %v475 = vadd.f32 %v353, %v474
          %v476 = vpop.f32.mrf.mxu0
          %v477 = vadd.f32 %v357, %v476
          %v478 = vpop.f32.mrf.mxu0
          %v479 = vadd.f32 %v353, %v478
          %v480 = vpop.f32.mrf.mxu0
          %v481 = vadd.f32 %v357, %v480
          %482 = vmatprep.mubr.bf16.mxu0 0
          %483 = vmatmul.mubr.bf16.gmra.mxu0 %v329
          %v484 = vpop.f32.mrf.mxu0
          %v485 = vadd.f32 %v353, %v484
          %v486 = vpop.f32.mrf.mxu0
          %v487 = vadd.f32 %v357, %v486
          %v488 = vpop.f32.mrf.mxu0
          %v489 = vadd.f32 %v353, %v488
          %v490 = vpop.f32.mrf.mxu0
          %v491 = vadd.f32 %v357, %v490
          %492 = vmatprep.mubr.bf16.mxu0 0
          %493 = vmatmul.mubr.bf16.gmra.mxu0 %v330
          %v494 = vpop.f32.mrf.mxu0
          %v495 = vadd.f32 %v353, %v494
          %v496 = vpop.f32.mrf.mxu0
          %v497 = vadd.f32 %v357, %v496
          %v498 = vpop.f32.mrf.mxu0
          %v499 = vadd.f32 %v353, %v498
          %v500 = vpop.f32.mrf.mxu0
          %v501 = vadd.f32 %v357, %v500
          %502 = vmatprep.mubr.bf16.mxu0 0
          %503 = vmatmul.mubr.bf16.gmra.mxu0 %v331
          %v504 = vpop.f32.mrf.mxu0
          %v505 = vadd.f32 %v353, %v504
          %v506 = vpop.f32.mrf.mxu0
          %v507 = vadd.f32 %v357, %v506
          %v508 = vpop.f32.mrf.mxu0
          %v509 = vadd.f32 %v353, %v508
          %v510 = vpop.f32.mrf.mxu0
          %v511 = vadd.f32 %v357, %v510
          %512 = vdwg.mxu0
          %v513 = vpack.c.bf16 %v479, %v475
          %v514 = vpack.c.bf16 %v481, %v477
          %v515 = vpack.c.bf16 %v489, %v485
          %v516 = vpack.c.bf16 %v491, %v487
          %v517 = vpack.c.bf16 %v499, %v495
          %v518 = vpack.c.bf16 %v501, %v497
          %v519 = vpack.c.bf16 %v509, %v505
          %v520 = vpack.c.bf16 %v511, %v507
          %v529 = vunpack.c.l.b16 %v513
          %v530 = vunpack.c.l.b16 %v514
          %v531 = vunpack.c.h.b16 %v513
          %v532 = vunpack.c.h.b16 %v514
          %v533 = vunpack.c.l.b16 %v515
          %v534 = vunpack.c.l.b16 %v516
          %v535 = vunpack.c.h.b16 %v515
          %v536 = vunpack.c.h.b16 %v516
          %v537 = vunpack.c.l.b16 %v517
          %v538 = vunpack.c.l.b16 %v518
          %v539 = vunpack.c.h.b16 %v517
          %v540 = vunpack.c.h.b16 %v518
          %v541 = vunpack.c.l.b16 %v519
          %v542 = vunpack.c.l.b16 %v520
          %v543 = vunpack.c.h.b16 %v519
          %v544 = vunpack.c.h.b16 %v520
          %v545 = vpack.c.b16 %v530, %v529
          %v546 = vpack.c.b16 %v532, %v531
          %v547 = vpack.c.b16 %v534, %v533
          %v548 = vpack.c.b16 %v536, %v535
          %v549 = vpack.c.b16 %v538, %v537
          %v550 = vpack.c.b16 %v540, %v539
          %v551 = vpack.c.b16 %v542, %v541
          %v552 = vpack.c.b16 %v544, %v543
          %561 = vst [vmem:[#allocation2] sm:$0xff] %v545
          %562 = vst [vmem:[#allocation2 + $0x8] sm:$0xff] %v546
          %563 = vst [vmem:[#allocation2 + $0x10] sm:$0xff] %v547
          %564 = vst [vmem:[#allocation2 + $0x18] sm:$0xff] %v548
          %565 = vst [vmem:[#allocation2 + $0x20] sm:$0xff] %v549
          %566 = vst [vmem:[#allocation2 + $0x28] sm:$0xff] %v550
          %567 = vst [vmem:[#allocation2 + $0x30] sm:$0xff] %v551
          %568 = vst [vmem:[#allocation2 + $0x38] sm:$0xff] %v552
          %v569 = vld [vmem:[#allocation10] sm:$0xf]
          %v570 = vld [vmem:[#allocation10 + $0x4] sm:$0xf]
          %v571 = vld [vmem:[#allocation10 + $0x8] sm:$0xf]
          %v572 = vld [vmem:[#allocation10 + $0xc] sm:$0xf]
          %v573 = vld [vmem:[#allocation10 + $0x10] sm:$0xf]
          %v574 = vld [vmem:[#allocation10 + $0x14] sm:$0xf]
          %v575 = vld [vmem:[#allocation10 + $0x18] sm:$0xf]
          %v576 = vld [vmem:[#allocation10 + $0x1c] sm:$0xf]
          %v577 = vld [vmem:[#allocation10 + $0x20] sm:$0xf]
          %v578 = vld [vmem:[#allocation10 + $0x24] sm:$0xf]
          %v579 = vld [vmem:[#allocation10 + $0x28] sm:$0xf]
          %v580 = vld [vmem:[#allocation10 + $0x2c] sm:$0xf]
          %v581 = vld [vmem:[#allocation10 + $0x30] sm:$0xf]
          %v582 = vld [vmem:[#allocation10 + $0x34] sm:$0xf]
          %v583 = vld [vmem:[#allocation10 + $0x38] sm:$0xf]
          %v584 = vld [vmem:[#allocation10 + $0x3c] sm:$0xf]
          %v585 = vld [vmem:[%s4] sm:$0x1]
          %v587 = vlaneseq
          %v588 = vshrl.u32 %v587, 7
          %v589 = vsub.s32 0, %v588
          %v590 = vrot.slane %v585, %v589
          %v608 = vunpack.c.l.b16 %v569
          %v609 = vunpack.c.l.b16 %v570
          %v610 = vunpack.c.l.b16 %v571
          %v611 = vunpack.c.l.b16 %v572
          %v612 = vunpack.c.l.b16 %v573
          %v613 = vunpack.c.l.b16 %v574
          %v614 = vunpack.c.l.b16 %v575
          %v615 = vunpack.c.l.b16 %v576
          %v616 = vunpack.c.l.b16 %v577
          %v617 = vunpack.c.l.b16 %v578
          %v618 = vunpack.c.l.b16 %v579
          %v619 = vunpack.c.l.b16 %v580
          %v620 = vunpack.c.l.b16 %v581
          %v621 = vunpack.c.l.b16 %v582
          %v622 = vunpack.c.l.b16 %v583
          %v623 = vunpack.c.l.b16 %v584
          %v624 = vpack.c.b16 %v609, %v608
          %v625 = vpack.c.b16 %v611, %v610
          %v626 = vpack.c.b16 %v613, %v612
          %v627 = vpack.c.b16 %v615, %v614
          %v628 = vpack.c.b16 %v617, %v616
          %v629 = vpack.c.b16 %v619, %v618
          %v630 = vpack.c.b16 %v621, %v620
          %v631 = vpack.c.b16 %v623, %v622
          %640 = vmatprep.subr.bf16.mxu0 0
          %641 = vmatpush1.bf16.msra.mxu0 %v631
          %642 = vmatprep.subr.bf16.mxu0 0
          %643 = vmatpush1.bf16.msra.mxu0 %v630
          %644 = vmatprep.subr.bf16.mxu0 0
          %645 = vmatpush1.bf16.msra.mxu0 %v629
          %646 = vmatprep.subr.bf16.mxu0 0
          %647 = vmatpush1.bf16.msra.mxu0 %v628
          %648 = vmatprep.subr.bf16.mxu0 0
          %649 = vmatpush1.bf16.msra.mxu0 %v627
          %650 = vmatprep.subr.bf16.mxu0 0
          %651 = vmatpush1.bf16.msra.mxu0 %v626
          %652 = vmatprep.subr.bf16.mxu0 0
          %653 = vmatpush1.bf16.msra.mxu0 %v625
          %654 = vmatprep.subr.bf16.mxu0 0
          %655 = vmatpush1.bf16.msra.mxu0 %v624
          %656 = vmatprep.subr.bf16.mxu0 0
          %657 = vmatpush2.bf16.msra.mxu0 0
          %658 = vmatprep.subr.bf16.mxu0 0
          %659 = vmatpush2.bf16.msra.mxu0 0
          %660 = vmatprep.subr.bf16.mxu0 0
          %661 = vmatpush2.bf16.msra.mxu0 0
          %662 = vmatprep.subr.bf16.mxu0 0
          %663 = vmatpush2.bf16.msra.mxu0 0
          %664 = vmatprep.subr.bf16.mxu0 0
          %665 = vmatpush2.bf16.msra.mxu0 0
          %666 = vmatprep.subr.bf16.mxu0 0
          %667 = vmatpush2.bf16.msra.mxu0 0
          %668 = vmatprep.subr.bf16.mxu0 0
          %669 = vmatpush2.bf16.msra.mxu0 0
          %670 = vmatprep.subr.bf16.mxu0 0
          %671 = vmatpush2.bf16.msra.mxu0 0
          %672 = vmatprep.mubr.bf16.mxu0 0
          %673 = vmatmul.mubr.bf16.gmra.mxu0 %v328
          %v674 = vpop.f32.mrf.mxu0
          %v675 = vadd.f32 %v590, %v674
          %v676 = vpop.f32.mrf.mxu0
          %v677 = vpop.f32.mrf.mxu0
          %v678 = vadd.f32 %v590, %v677
          %v679 = vpop.f32.mrf.mxu0
          %680 = vmatprep.mubr.bf16.mxu0 0
          %681 = vmatmul.mubr.bf16.gmra.mxu0 %v329
          %v682 = vpop.f32.mrf.mxu0
          %v683 = vadd.f32 %v590, %v682
          %v684 = vpop.f32.mrf.mxu0
          %v685 = vpop.f32.mrf.mxu0
          %v686 = vadd.f32 %v590, %v685
          %v687 = vpop.f32.mrf.mxu0
          %688 = vmatprep.mubr.bf16.mxu0 0
          %689 = vmatmul.mubr.bf16.gmra.mxu0 %v330
          %v690 = vpop.f32.mrf.mxu0
          %v691 = vadd.f32 %v590, %v690
          %v692 = vpop.f32.mrf.mxu0
          %v693 = vpop.f32.mrf.mxu0
          %v694 = vadd.f32 %v590, %v693
          %v695 = vpop.f32.mrf.mxu0
          %696 = vmatprep.mubr.bf16.mxu0 0
          %697 = vmatmul.mubr.bf16.gmra.mxu0 %v331
          %v698 = vpop.f32.mrf.mxu0
          %v699 = vadd.f32 %v590, %v698
          %v700 = vpop.f32.mrf.mxu0
          %v701 = vpop.f32.mrf.mxu0
          %v702 = vadd.f32 %v590, %v701
          %v703 = vpop.f32.mrf.mxu0
          %704 = vdwg.mxu0
          %v705 = vpack.c.bf16 %v678, %v675
          %v706 = vpack.c.bf16 %v686, %v683
          %v707 = vpack.c.bf16 %v694, %v691
          %v708 = vpack.c.bf16 %v702, %v699
          %v713 = vunpack.c.l.b16 %v705
          %v714 = vunpack.c.h.b16 %v705
          %v715 = vunpack.c.l.b16 %v706
          %v716 = vunpack.c.h.b16 %v706
          %v717 = vunpack.c.l.b16 %v707
          %v718 = vunpack.c.h.b16 %v707
          %v719 = vunpack.c.l.b16 %v708
          %v720 = vunpack.c.h.b16 %v708
          %v721 = vpack.c.b16 %v713, %v713
          %v722 = vpack.c.b16 %v714, %v714
          %v723 = vpack.c.b16 %v715, %v715
          %v724 = vpack.c.b16 %v716, %v716
          %v725 = vpack.c.b16 %v717, %v717
          %v726 = vpack.c.b16 %v718, %v718
          %v727 = vpack.c.b16 %v719, %v719
          %v728 = vpack.c.b16 %v720, %v720
          %737 = vst [vmem:[#allocation3] sm:$0xf] %v721
          %738 = vst [vmem:[#allocation3 + $0x4] sm:$0xf] %v722
          %739 = vst [vmem:[#allocation3 + $0x8] sm:$0xf] %v723
          %740 = vst [vmem:[#allocation3 + $0xc] sm:$0xf] %v724
          %741 = vst [vmem:[#allocation3 + $0x10] sm:$0xf] %v725
          %742 = vst [vmem:[#allocation3 + $0x14] sm:$0xf] %v726
          %743 = vst [vmem:[#allocation3 + $0x18] sm:$0xf] %v727
          %744 = vst [vmem:[#allocation3 + $0x1c] sm:$0xf] %v728
        $region60: #{tpu_custom_call.1} parent=43 // pred_fallthru
          _
        %s745 = smul.u32 %s30, 64
        %s746 = sshra.s32 %s745, 3
        %s747 = sand.u32 %s745, 7
        %s748 = smul.u32 %s746, 2
        %s749 = smul.addr %s748, 4
        %s750 = scalar_lea.vmem [#allocation2], %s749
        %v751 = vld [vmem:[%s750] sm:$0xf]
        %v752 = vld [vmem:[%s750 + $0x8] sm:$0xf]
        %v753 = vld [vmem:[%s750 + $0x10] sm:$0xf]
        %v754 = vld [vmem:[%s750 + $0x18] sm:$0xf]
        %v755 = vld [vmem:[%s750 + $0x20] sm:$0xf]
        %v756 = vld [vmem:[%s750 + $0x28] sm:$0xf]
        %v757 = vld [vmem:[%s750 + $0x30] sm:$0xf]
        %v758 = vld [vmem:[%s750 + $0x38] sm:$0xf]
        %v759 = vld [vmem:[#allocation2 + $0x4] sm:$0xf]
        %v760 = vld [vmem:[#allocation2 + $0xc] sm:$0xf]
        %v761 = vld [vmem:[#allocation2 + $0x14] sm:$0xf]
        %v762 = vld [vmem:[#allocation2 + $0x1c] sm:$0xf]
        %v763 = vld [vmem:[#allocation2 + $0x24] sm:$0xf]
        %v764 = vld [vmem:[#allocation2 + $0x2c] sm:$0xf]
        %v765 = vld [vmem:[#allocation2 + $0x34] sm:$0xf]
        %v766 = vld [vmem:[#allocation2 + $0x3c] sm:$0xf]
        %v775 = vunpack.c.l.b16 %v751
        %v776 = vunpack.c.l.b16 %v752
        %v777 = vunpack.c.l.b16 %v753
        %v778 = vunpack.c.l.b16 %v754
        %v779 = vunpack.c.l.b16 %v755
        %v780 = vunpack.c.l.b16 %v756
        %v781 = vunpack.c.l.b16 %v757
        %v782 = vunpack.c.l.b16 %v758
        %v783 = vpack.c.b16 %v776, %v775
        %v784 = vpack.c.b16 %v778, %v777
        %v785 = vpack.c.b16 %v780, %v779
        %v786 = vpack.c.b16 %v782, %v781
        %v799 = vunpack.c.l.b16 %v759
        %v800 = vunpack.c.l.b16 %v760
        %v801 = vunpack.c.l.b16 %v761
        %v802 = vunpack.c.l.b16 %v762
        %v803 = vunpack.c.l.b16 %v763
        %v804 = vunpack.c.l.b16 %v764
        %v805 = vunpack.c.l.b16 %v765
        %v806 = vunpack.c.l.b16 %v766
        %v807 = vpack.c.b16 %v800, %v799
        %v808 = vpack.c.b16 %v802, %v801
        %v809 = vpack.c.b16 %v804, %v803
        %v810 = vpack.c.b16 %v806, %v805
        %815 = vmatprep.subr.bf16.mxu0 0
        %816 = vmatpush1.bf16.xpose.msra.mxu0 0
        %817 = vmatprep.subr.bf16.mxu0 0
        %818 = vmatpush1.bf16.xpose.msra.mxu0 0
        %819 = vmatprep.subr.bf16.mxu0 0
        %820 = vmatpush1.bf16.xpose.msra.mxu0 0
        %821 = vmatprep.subr.bf16.mxu0 0
        %822 = vmatpush1.bf16.xpose.msra.mxu0 0
        %823 = vmatprep.subr.bf16.mxu0 0
        %824 = vmatpush1.bf16.xpose.msra.mxu0 %v810
        %825 = vmatprep.subr.bf16.mxu0 0
        %826 = vmatpush1.bf16.xpose.msra.mxu0 %v809
        %827 = vmatprep.subr.bf16.mxu0 0
        %828 = vmatpush1.bf16.xpose.msra.mxu0 %v808
        %829 = vmatprep.subr.bf16.mxu0 0
        %830 = vmatpush1.bf16.xpose.msra.mxu0 %v807
        %831 = vmatprep.subr.bf16.mxu0 0
        %832 = vmatpush2.bf16.xpose.msra.mxu0 0
        %833 = vmatprep.subr.bf16.mxu0 0
        %834 = vmatpush2.bf16.xpose.msra.mxu0 0
        %835 = vmatprep.subr.bf16.mxu0 0
        %836 = vmatpush2.bf16.xpose.msra.mxu0 0
        %837 = vmatprep.subr.bf16.mxu0 0
        %838 = vmatpush2.bf16.xpose.msra.mxu0 0
        %839 = vmatprep.subr.bf16.mxu0 0
        %840 = vmatpush2.bf16.xpose.msra.mxu0 0
        %841 = vmatprep.subr.bf16.mxu0 0
        %842 = vmatpush2.bf16.xpose.msra.mxu0 0
        %843 = vmatprep.subr.bf16.mxu0 0
        %844 = vmatpush2.bf16.xpose.msra.mxu0 0
        %845 = vmatprep.subr.bf16.mxu0 0
        %846 = vmatpush2.bf16.xpose.msra.mxu0 0
        %847 = vmatprep.mubr.bf16.mxu0 0
        %848 = vmatmul.mubr.bf16.gmra.mxu0 %v783
        %v849 = vpop.f32.mrf.mxu0
        %v850 = vadd.f32 0.0, %v849
        %v851 = vpop.f32.mrf.mxu0
        %v852 = vpop.f32.mrf.mxu0
        %v853 = vadd.f32 0.0, %v852
        %v854 = vpop.f32.mrf.mxu0
        %855 = vmatprep.mubr.bf16.mxu0 0
        %856 = vmatmul.mubr.bf16.gmra.mxu0 %v784
        %v857 = vpop.f32.mrf.mxu0
        %v858 = vadd.f32 0.0, %v857
        %v859 = vpop.f32.mrf.mxu0
        %v860 = vpop.f32.mrf.mxu0
        %v861 = vadd.f32 0.0, %v860
        %v862 = vpop.f32.mrf.mxu0
        %863 = vmatprep.mubr.bf16.mxu0 0
        %864 = vmatmul.mubr.bf16.gmra.mxu0 %v785
        %v865 = vpop.f32.mrf.mxu0
        %v866 = vadd.f32 0.0, %v865
        %v867 = vpop.f32.mrf.mxu0
        %v868 = vpop.f32.mrf.mxu0
        %v869 = vadd.f32 0.0, %v868
        %v870 = vpop.f32.mrf.mxu0
        %871 = vmatprep.mubr.bf16.mxu0 0
        %872 = vmatmul.mubr.bf16.gmra.mxu0 %v786
        %v873 = vpop.f32.mrf.mxu0
        %v874 = vadd.f32 0.0, %v873
        %v875 = vpop.f32.mrf.mxu0
        %v876 = vpop.f32.mrf.mxu0
        %v877 = vadd.f32 0.0, %v876
        %v878 = vpop.f32.mrf.mxu0
        %879 = vdwg.mxu0
        %vm880 = vcmask 523264
        %v881 = vsel %vm880, %v850, -inf
        %882 = vmax.xlane.f32.xlu0 %v881
        %v883 = vpop.xlane.xlu0 %882
        %v884 = vsel %vm880, %v853, -inf
        %885 = vmax.xlane.f32.xlu0 %v884
        %v886 = vpop.xlane.xlu0 %885
        %v887 = vsel %vm880, %v858, -inf
        %888 = vmax.xlane.f32.xlu0 %v887
        %v889 = vpop.xlane.xlu0 %888
        %v890 = vsel %vm880, %v861, -inf
        %891 = vmax.xlane.f32.xlu0 %v890
        %v892 = vpop.xlane.xlu0 %891
        %v893 = vsel %vm880, %v866, -inf
        %894 = vmax.xlane.f32.xlu0 %v893
        %v895 = vpop.xlane.xlu0 %894
        %v896 = vsel %vm880, %v869, -inf
        %897 = vmax.xlane.f32.xlu0 %v896
        %v898 = vpop.xlane.xlu0 %897
        %v899 = vsel %vm880, %v874, -inf
        %900 = vmax.xlane.f32.xlu0 %v899
        %v901 = vpop.xlane.xlu0 %900
        %v902 = vsel %vm880, %v877, -inf
        %903 = vmax.xlane.f32.xlu0 %v902
        %v904 = vpop.xlane.xlu0 %903
        %v905 = vsub.f32 %v850, %v883
        %v906 = vsub.f32 %v853, %v886
        %v907 = vsub.f32 %v858, %v889
        %v908 = vsub.f32 %v861, %v892
        %v909 = vsub.f32 %v866, %v895
        %v910 = vsub.f32 %v869, %v898
        %v911 = vsub.f32 %v874, %v901
        %v912 = vsub.f32 %v877, %v904
        %v913 = vmul.f32 %v905, 1.442695
        %v914 = vpow.pop %v913
        %v915 = vmul.f32 %v906, 1.442695
        %v916 = vpow.pop %v915
        %v917 = vmul.f32 %v907, 1.442695
        %v918 = vpow.pop %v917
        %v919 = vmul.f32 %v908, 1.442695
        %v920 = vpow.pop %v919
        %v921 = vmul.f32 %v909, 1.442695
        %v922 = vpow.pop %v921
        %v923 = vmul.f32 %v910, 1.442695
        %v924 = vpow.pop %v923
        %v925 = vmul.f32 %v911, 1.442695
        %v926 = vpow.pop %v925
        %v927 = vmul.f32 %v912, 1.442695
        %v928 = vpow.pop %v927
        %v929 = vsel %vm880, %v914, 0.0
        %930 = vadd.xlane.f32.xlu0 %v929
        %v931 = vpop.xlane.xlu0 %930
        %v932 = vsel %vm880, %v916, 0.0
        %933 = vadd.xlane.f32.xlu0 %v932
        %v934 = vpop.xlane.xlu0 %933
        %v935 = vsel %vm880, %v918, 0.0
        %936 = vadd.xlane.f32.xlu0 %v935
        %v937 = vpop.xlane.xlu0 %936
        %v938 = vsel %vm880, %v920, 0.0
        %939 = vadd.xlane.f32.xlu0 %v938
        %v940 = vpop.xlane.xlu0 %939
        %v941 = vsel %vm880, %v922, 0.0
        %942 = vadd.xlane.f32.xlu0 %v941
        %v943 = vpop.xlane.xlu0 %942
        %v944 = vsel %vm880, %v924, 0.0
        %945 = vadd.xlane.f32.xlu0 %v944
        %v946 = vpop.xlane.xlu0 %945
        %v947 = vsel %vm880, %v926, 0.0
        %948 = vadd.xlane.f32.xlu0 %v947
        %v949 = vpop.xlane.xlu0 %948
        %v950 = vsel %vm880, %v928, 0.0
        %951 = vadd.xlane.f32.xlu0 %v950
        %v952 = vpop.xlane.xlu0 %951
        %v953 = vrcp.pop %v931
        %v954 = vrcp.pop %v934
        %v955 = vrcp.pop %v937
        %v956 = vrcp.pop %v940
        %v957 = vrcp.pop %v943
        %v958 = vrcp.pop %v946
        %v959 = vrcp.pop %v949
        %v960 = vrcp.pop %v952
        %v961 = vmul.f32 %v914, %v953
        %v962 = vmul.f32 %v916, %v954
        %v963 = vmul.f32 %v918, %v955
        %v964 = vmul.f32 %v920, %v956
        %v965 = vmul.f32 %v922, %v957
        %v966 = vmul.f32 %v924, %v958
        %v967 = vmul.f32 %v926, %v959
        %v968 = vmul.f32 %v928, %v960
        %v969 = vpack.c.bf16 %v962, %v961
        %v970 = vpack.c.bf16 %v964, %v963
        %v971 = vpack.c.bf16 %v966, %v965
        %v972 = vpack.c.bf16 %v968, %v967
        %v973 = vld [vmem:[#allocation3] sm:$0xf]
        %v974 = vld [vmem:[#allocation3 + $0x4] sm:$0xf]
        %v975 = vld [vmem:[#allocation3 + $0x8] sm:$0xf]
        %v976 = vld [vmem:[#allocation3 + $0xc] sm:$0xf]
        %v977 = vld [vmem:[#allocation3 + $0x10] sm:$0xf]
        %v978 = vld [vmem:[#allocation3 + $0x14] sm:$0xf]
        %v979 = vld [vmem:[#allocation3 + $0x18] sm:$0xf]
        %v980 = vld [vmem:[#allocation3 + $0x1c] sm:$0xf]
        %v989 = vunpack.c.l.b16 %v973
        %v990 = vunpack.c.l.b16 %v974
        %v991 = vunpack.c.l.b16 %v975
        %v992 = vunpack.c.l.b16 %v976
        %v993 = vunpack.c.l.b16 %v977
        %v994 = vunpack.c.l.b16 %v978
        %v995 = vunpack.c.l.b16 %v979
        %v996 = vunpack.c.l.b16 %v980
        %v997 = vpack.c.b16 %v990, %v989
        %v998 = vpack.c.b16 %v992, %v991
        %v999 = vpack.c.b16 %v994, %v993
        %v1000 = vpack.c.b16 %v996, %v995
        %v1006 = vsel %vm880, %v969, 0
        %v1009 = vsel %vm880, %v970, 0
        %v1012 = vsel %vm880, %v971, 0
        %v1015 = vsel %vm880, %v972, 0
        %1017 = vmatprep.subr.bf16.mxu0 0
        %1018 = vmatpush1.bf16.msra.mxu0 0
        %1019 = vmatprep.subr.bf16.mxu0 0
        %1020 = vmatpush1.bf16.msra.mxu0 0
        %1021 = vmatprep.subr.bf16.mxu0 0
        %1022 = vmatpush1.bf16.msra.mxu0 0
        %1023 = vmatprep.subr.bf16.mxu0 0
        %1024 = vmatpush1.bf16.msra.mxu0 0
        %1025 = vmatprep.subr.bf16.mxu0 0
        %1026 = vmatpush1.bf16.msra.mxu0 %v1000
        %1027 = vmatprep.subr.bf16.mxu0 0
        %1028 = vmatpush1.bf16.msra.mxu0 %v999
        %1029 = vmatprep.subr.bf16.mxu0 0
        %1030 = vmatpush1.bf16.msra.mxu0 %v998
        %1031 = vmatprep.subr.bf16.mxu0 0
        %1032 = vmatpush1.bf16.msra.mxu0 %v997
        %1033 = vmatprep.subr.bf16.mxu0 0
        %1034 = vmatpush2.bf16.msra.mxu0 0
        %1035 = vmatprep.subr.bf16.mxu0 0
        %1036 = vmatpush2.bf16.msra.mxu0 0
        %1037 = vmatprep.subr.bf16.mxu0 0
        %1038 = vmatpush2.bf16.msra.mxu0 0
        %1039 = vmatprep.subr.bf16.mxu0 0
        %1040 = vmatpush2.bf16.msra.mxu0 0
        %1041 = vmatprep.subr.bf16.mxu0 0
        %1042 = vmatpush2.bf16.msra.mxu0 0
        %1043 = vmatprep.subr.bf16.mxu0 0
        %1044 = vmatpush2.bf16.msra.mxu0 0
        %1045 = vmatprep.subr.bf16.mxu0 0
        %1046 = vmatpush2.bf16.msra.mxu0 0
        %1047 = vmatprep.subr.bf16.mxu0 0
        %1048 = vmatpush2.bf16.msra.mxu0 0
        %1049 = vmatprep.mubr.bf16.mxu0 0
        %1050 = vmatmul.mubr.bf16.gmra.mxu0 %v1006
        %v1051 = vpop.f32.mrf.mxu0
        %v1052 = vadd.f32 0.0, %v1051
        %v1053 = vpop.f32.mrf.mxu0
        %v1054 = vpop.f32.mrf.mxu0
        %v1055 = vadd.f32 0.0, %v1054
        %v1056 = vpop.f32.mrf.mxu0
        %1057 = vmatprep.mubr.bf16.mxu0 0
        %1058 = vmatmul.mubr.bf16.gmra.mxu0 %v1009
        %v1059 = vpop.f32.mrf.mxu0
        %v1060 = vadd.f32 0.0, %v1059
        %v1061 = vpop.f32.mrf.mxu0
        %v1062 = vpop.f32.mrf.mxu0
        %v1063 = vadd.f32 0.0, %v1062
        %v1064 = vpop.f32.mrf.mxu0
        %1065 = vmatprep.mubr.bf16.mxu0 0
        %1066 = vmatmul.mubr.bf16.gmra.mxu0 %v1012
        %v1067 = vpop.f32.mrf.mxu0
        %v1068 = vadd.f32 0.0, %v1067
        %v1069 = vpop.f32.mrf.mxu0
        %v1070 = vpop.f32.mrf.mxu0
        %v1071 = vadd.f32 0.0, %v1070
        %v1072 = vpop.f32.mrf.mxu0
        %1073 = vmatprep.mubr.bf16.mxu0 0
        %1074 = vmatmul.mubr.bf16.gmra.mxu0 %v1015
        %v1075 = vpop.f32.mrf.mxu0
        %v1076 = vadd.f32 0.0, %v1075
        %v1077 = vpop.f32.mrf.mxu0
        %v1078 = vpop.f32.mrf.mxu0
        %v1079 = vadd.f32 0.0, %v1078
        %v1080 = vpop.f32.mrf.mxu0
        %1081 = vdwg.mxu0
        %s1082 = scalar_lea.vmem %s277, %s745 [#allocation5]
        %v1083 = vld [vmem:[%s1082] sm:$0xff]
        %v1084 = vld [vmem:[%s1082 + $0x8] sm:$0xff]
        %v1085 = vld [vmem:[%s1082 + $0x10] sm:$0xff]
        %v1086 = vld [vmem:[%s1082 + $0x18] sm:$0xff]
        %v1087 = vld [vmem:[%s1082 + $0x20] sm:$0xff]
        %v1088 = vld [vmem:[%s1082 + $0x28] sm:$0xff]
        %v1089 = vld [vmem:[%s1082 + $0x30] sm:$0xff]
        %v1090 = vld [vmem:[%s1082 + $0x38] sm:$0xff]
        %s1091 = sld [smem:[#allocation4]]
        %v1092 = vstv %s1091
        %v1093 = vmul.f32 %v1092, %v1052
        %v1094 = vmul.f32 %v1092, %v1055
        %v1095 = vmul.f32 %v1092, %v1060
        %v1096 = vmul.f32 %v1092, %v1063
        %v1097 = vmul.f32 %v1092, %v1068
        %v1098 = vmul.f32 %v1092, %v1071
        %v1099 = vmul.f32 %v1092, %v1076
        %v1100 = vmul.f32 %v1092, %v1079
        %v1101 = vadd.f32 %v1093, %v1083
        %v1102 = vadd.f32 %v1094, %v1084
        %v1103 = vadd.f32 %v1095, %v1085
        %v1104 = vadd.f32 %v1096, %v1086
        %v1105 = vadd.f32 %v1097, %v1087
        %v1106 = vadd.f32 %v1098, %v1088
        %v1107 = vadd.f32 %v1099, %v1089
        %v1108 = vadd.f32 %v1100, %v1090
        %1109 = vst [vmem:[%s313] sm:$0xff] %v1101
        %1110 = vst [vmem:[%s313 + $0x8] sm:$0xff] %v1102
        %1111 = vst [vmem:[%s313 + $0x10] sm:$0xff] %v1103
        %1112 = vst [vmem:[%s313 + $0x18] sm:$0xff] %v1104
        %1113 = vst [vmem:[%s313 + $0x20] sm:$0xff] %v1105
        %1114 = vst [vmem:[%s313 + $0x28] sm:$0xff] %v1106
        %1115 = vst [vmem:[%s313 + $0x30] sm:$0xff] %v1107
        %1116 = vst [vmem:[%s313 + $0x38] sm:$0xff] %v1108
        %s1117 = sand.u32 %s178, 1
        %s1118 = scalar_lea.sflag [#allocation7], %s1117
        %s1119 = sand.u32 %s178, 1
        %s1120 = smul.addr %s1119, 64
        %s1121 = scalar_lea.vmem [#allocation11], %s1120
        // Predicated region
        $region61: #{tpu_custom_call.1} parent=43 // pred_check
          %p1122 = pneg %p188
        $region62: #{tpu_custom_call.1} parent=43 // pred_check_branch
          %1124 = sbr.rel (%p1122) target = $region64
        $region63: #{tpu_custom_call.1} parent=43 // pred_region
          %s1125 = smul.u32 8, %s30
          %s1127 = ssub.s32 1024, 1024
          %1128 = vsyncadd %s1118, %s1127
          %s1129 = smul.addr %s29, 8
          %s1130 = sadd.s32 %s1125, %s1129
          %s1131 = smul.addr %s1130, 128
          %s1132 = scalar_lea.hbm %s6, %s1131
          %s1133 = sshll.u32 %s1121, 4
          %s1134 = int_to_ptr.vmem [resolvable:$true] %s1133
          %1139 = dma.vmem_to_hbm [thread:$0]  %s1134, 1024, %s1132, %s1118, 128, 128, 8
        $region64: #{tpu_custom_call.1} parent=43 // pred_fallthru
          _
      $region44: #{tpu_custom_call.1} parent=5 // pred_fallthru
        _
      %p1140 = scmp.le.s32.totalorder 2, %s20
      // Predicated region
      $region65: #{tpu_custom_call.1} parent=5 // pred_check
        %p1141 = pneg %p1140
      $region66: #{tpu_custom_call.1} parent=5 // pred_check_branch
        %1143 = sbr.rel (%p1141) target = $region68
      $region67: #{tpu_custom_call.1} parent=5 // pred_region
        %s1144 = ssub.s32 %s20, 2
        // Predicated region
        $region69: #{tpu_custom_call.1} parent=67 // pred_check
          %p1145 = pneg %p194
        $region70: #{tpu_custom_call.1} parent=67 // pred_check_branch
          %1147 = sbr.rel (%p1145) target = $region72
        $region71: #{tpu_custom_call.1} parent=67 // pred_region
          %s1148 = sand.u32 %s179, 1
          %s1149 = scalar_lea.sflag [#allocation7], %s1148
          %s1150 = sand.u32 %s179, 1
          %s1151 = smul.addr %s1150, 64
          %s1152 = scalar_lea.vmem [#allocation11], %s1151
          %1153 = dma.done %s1149, 1024
        $region72: #{tpu_custom_call.1} parent=67 // pred_fallthru
          _
      $region68: #{tpu_custom_call.1} parent=5 // pred_fallthru
        _
    $region6: #{tpu_custom_call.1} parent=1 // loop_footer
      %s24 = sadd.s32 1, %s20
    $region7: #{tpu_custom_call.1} parent=1 // loop_footer_branch
      %19 = sbr.rel target = $region3
    $region8: #{tpu_custom_call.1} parent=1 // loop_exit
      _
    %1154 = vsyncpa [#allocation6], 1
    %s1155 = scalar_lea.sflag [#allocation6], 1
    %1156 = vsyncpa %s1155, 1
    %1157 = vsyncpa [#allocation9], 1
    %1158 = vsyncpa [#allocation7], 1
    %s1159 = scalar_lea.sflag [#allocation7], 1
    %1160 = vsyncpa %s1159, 1

</llo_original>
